<compile_context>
chip_gen: v5e
topology: v5e:2x2
jax: 0.10.0
libtpu: 0.0.40
codegen_flags: <defaults>
</compile_context>

<pallas_src>
import functools
import math

import jax
import jax.numpy as jnp
from jax.experimental import pallas as pl
from jax.experimental.pallas import tpu as pltpu

NEG_SLOPE = 0.1


def _round_up(x, m):
    return ((x + m - 1) // m) * m


def _down_kernel(p00_ref, p01_ref, p10_ref, p11_ref, w_ref, b_ref, o_ref, *,
                 K, PW, TM, fold_taps):
    """One (image, output-row-strip) step of Conv(k=K, stride=2, SAME) + LeakyReLU(0.1).

    p??_ref : (1, 1, CIN, W_LEN) channel-major halo'd window of one stride-2 phase
              (row parity, col parity) for this row strip.
    w_ref   : fold: (COUT, K*K*CIN)  |  per-tap: (K*K, COUT, CIN)   (grid-resident)
    b_ref   : (COUT, 1) f32                                          (grid-resident)
    o_ref   : (1, COUT, TM)  lane-dense output tile, TM = TOH*PW (multiple of 128)
    """
    phase = ((p00_ref, p01_ref), (p10_ref, p11_ref))

    def tap_from(win_or_ref, kh, kw, from_value):
        hp, ro = kh % 2, kh // 2          # row parity / row offset inside the phase
        wp, co = kw % 2, kw // 2          # col parity / col offset inside the phase
        s = ro * PW + co                  # static lane offset of this tap
        if from_value:
            return win_or_ref[hp][wp][:, s:s + TM]            # (CIN, TM)
        return phase[hp][wp][0, 0, :, s:s + TM]               # (CIN, TM)

    if fold_taps:
        # Small Cin: hoist the 4 phase windows (one load per (row,col) parity), then
        # fold all K*K taps into the contraction axis -> a single MXU dot of depth
        # K*K*CIN instead of K*K tiny dots of depth CIN.  CIN is sublane-tile aligned
        # so the concat along the contraction (sublane) axis is cheap.
        win = [[phase[hp][wp][0, 0] for wp in (0, 1)] for hp in (0, 1)]
        rhs = jnp.concatenate(
            [tap_from(win, kh, kw, True) for kh in range(K) for kw in range(K)],
            axis=0)                                            # (K*K*CIN, TM)
        acc = jnp.dot(w_ref[...], rhs, preferred_element_type=jnp.float32)
    else:
        # Large Cin: contraction depth CIN already feeds the MXU; per-tap dots sliced
        # straight from the VMEM block (keeps value liveness small), accumulated in
        # the lane-dense (COUT, TM) orientation.
        acc = jnp.zeros(o_ref.shape[1:], jnp.float32)
        for kh in range(K):
            for kw in range(K):
                acc = acc + jnp.dot(w_ref[kh * K + kw],
                                    tap_from(None, kh, kw, False),
                                    preferred_element_type=jnp.float32)

    acc = acc + b_ref[...]                                     # (COUT,1) broadcasts over TM
    acc = jnp.where(acc >= 0.0, acc, NEG_SLOPE * acc)          # LeakyReLU(0.1), f32
    o_ref[0] = acc.astype(o_ref.dtype)                         # lane-dense store, no transpose


def downscale_forward(x_nchw, weight_oihw, bias, kernel_size=5, stride=2,
                      compute_dtype=jnp.bfloat16):
    """Conv2d(stride=2, TF-style SAME) + LeakyReLU(0.1).  Input/Output are NCHW.

    compute_dtype=bfloat16 (default) feeds the bf16-native MXU; accumulation, bias and
    the activation stay f32, so expect ~1e-2 relative error vs an f32 reference.
    Pass compute_dtype=jnp.float32 for bit-tight results.
    """
    assert stride == 2, "Downscale is defined with stride=2"
    N, Cin, H, W = x_nchw.shape
    Cout, wc_in, KH, KW = weight_oihw.shape
    K = kernel_size
    assert KH == K and KW == K and wc_in == Cin
    halo = (K - 1) // 2
    assert K % 2 == 1 and 1 <= halo <= 8

    # ---------------- TF-SAME geometry (extra pad goes bottom/right) ----------------
    OH, OW = -(-H // 2), -(-W // 2)
    pad_h = max((OH - 1) * 2 + K - H, 0)
    pad_w = max((OW - 1) * 2 + K - W, 0)
    ph0, pw0 = pad_h // 2, pad_w // 2

    # ---------------- tiling ----------------
    PW = _round_up(OW + halo, 8)            # phase width
    # Invariant: PW >= OW + halo, so a column tap that wraps into the next phase row
    # only ever pollutes padded output columns (>= OW) which the epilogue slices off.
    assert PW >= OW + halo

    isz = jnp.dtype(compute_dtype).itemsize
    osz = jnp.dtype(x_nchw.dtype).itemsize
    cin_align = 8 * (4 // isz)              # sublane-tile alignment for the contraction
    Cin_pad = _round_up(Cin, cin_align)
    Cout_pad = _round_up(Cout, 8)
    fold_taps = Cin < 32                    # small Cin: fold taps into the contraction

    toh_unit = 128 // math.gcd(PW, 128)     # smallest TOH with (TOH*PW) % 128 == 0
    target_rows = 1024 if Cout_pad <= 128 else 512   # keep f32 (Cout,TM) acc tile modest
    TOH = toh_unit * max(1, target_rows // (toh_unit * PW))
    TOH = min(TOH, _round_up(OH, toh_unit))
    OH_pad = _round_up(OH, TOH)
    T = OH_pad // TOH                       # row strips per image (grid axis 1)
    TM = TOH * PW                           # lane-dense tile width (multiple of 128)
    W_ROWS = TOH + halo + 1                 # halo'd phase rows needed per strip
    W_LEN = W_ROWS * PW                     # covers every tap slice [s, s+TM), s<=halo*PW+halo
    PH = OH_pad + halo + 1                  # phase rows built in the wrapper

    # -------- phase windows: ONE pad + 4 strided views, all in NCHW (channel-major) ----
    xp = jnp.pad(x_nchw.astype(compute_dtype),
                 ((0, 0), (0, Cin_pad - Cin),
                  (ph0, 2 * PH - H - ph0), (pw0, 2 * PW - W - pw0)))

    def phase_windows(hp, wp):
        ph_img = xp[:, :, hp::2, wp::2]                       # (N, Cin_pad, PH, PW)
        wins = [ph_img[:, :, t * TOH: t * TOH + W_ROWS, :] for t in range(T)]
        return jnp.stack(wins, axis=1).reshape(N, T, Cin_pad, W_LEN)

    p00, p01, p10, p11 = (phase_windows(0, 0), phase_windows(0, 1),
                          phase_windows(1, 0), phase_windows(1, 1))
    # TODO(synk): the 4 phase-window extractions are still separate XLA copies; a tiny
    # strided-DMA pre-kernel could produce them in a single HBM pass.

    # -------- weights / bias ----------
    w = jnp.transpose(weight_oihw, (2, 3, 0, 1))              # (K, K, Cout, Cin)
    w = jnp.pad(w, ((0, 0), (0, 0), (0, Cout_pad - Cout), (0, Cin_pad - Cin)))
    if fold_taps:
        # (Cout_pad, K*K*Cin_pad), rows ordered (kh, kw, ci) to match the in-kernel concat.
        w = jnp.transpose(w, (2, 0, 1, 3)).reshape(Cout_pad, K * K * Cin_pad)
        w_spec = pl.BlockSpec((Cout_pad, K * K * Cin_pad), lambda n, t: (0, 0))
    else:
        w = w.reshape(K * K, Cout_pad, Cin_pad)
        w_spec = pl.BlockSpec((K * K, Cout_pad, Cin_pad), lambda n, t: (0, 0, 0))
    w = w.astype(compute_dtype)
    b = jnp.pad(bias, (0, Cout_pad - Cout)).reshape(Cout_pad, 1).astype(jnp.float32)

    # ---------------- compiler hints ----------------
    M_out = OH_pad * PW
    flops = int(2 * K * K * Cin_pad * Cout_pad * N * M_out)
    bytes_accessed = int(4 * N * T * Cin_pad * W_LEN * isz + int(w.size) * isz
                         + Cout_pad * 4 + N * Cout_pad * M_out * osz)
    vmem_est = (2 * 4 * Cin_pad * W_LEN * isz           # double-buffered phase windows
                + int(w.size) * isz + Cout_pad * 4      # resident weights + bias
                + 2 * Cout_pad * TM * osz               # double-buffered output tile
                + 4 * Cin_pad * W_LEN * isz             # hoisted window values (fold path)
                + K * K * Cin_pad * TM * isz            # contraction slab (lives in VMEM)
                + Cout_pad * TM * 4)                    # f32 accumulator tile
    try:                                                # device-aware cap (~3/4 of physical)
        phys_vmem = pltpu.get_tpu_info().vmem_capacity_bytes
    except Exception:
        phys_vmem = 64 * 2**20                          # be conservative (v7x TensorCore)
    vmem_cap = min(100 * 2**20, (phys_vmem * 3) // 4)   # <=48 MiB on v7x, ~96 MiB on v5e/v6e
    vmem_limit = int(min(vmem_cap, max(32 * 2**20, 2 * vmem_est)))

    kernel = functools.partial(_down_kernel, K=K, PW=PW, TM=TM, fold_taps=fold_taps)
    phase_spec = pl.BlockSpec((1, 1, Cin_pad, W_LEN), lambda n, t: (n, t, 0, 0))

    out = pl.pallas_call(
        kernel,
        out_shape=jax.ShapeDtypeStruct((N, Cout_pad, M_out), x_nchw.dtype),
        grid=(N, T),
        in_specs=[phase_spec, phase_spec, phase_spec, phase_spec, w_spec,
                  pl.BlockSpec((Cout_pad, 1), lambda n, t: (0, 0))],
        out_specs=pl.BlockSpec((1, Cout_pad, TM), lambda n, t: (n, 0, t)),
        compiler_params=pltpu.CompilerParams(
            dimension_semantics=("parallel", "parallel"),
            vmem_limit_bytes=vmem_limit),
        cost_estimate=pl.CostEstimate(flops=flops, transcendentals=0,
                                      bytes_accessed=bytes_accessed),
    )(p00, p01, p10, p11, w, b)

    # (N, Cout_pad, OH_pad*PW) -> NCHW by reshape + slice only (no transpose pass).
    out = out.reshape(N, Cout_pad, OH_pad, PW)[:, :Cout, :OH, :OW]
    return out


def _reference(x_nchw, weight_oihw, bias, kernel_size=5, stride=2):
    """Pure-JAX reference (lax conv) for correctness checking."""
    _, _, H, W = x_nchw.shape
    K = kernel_size
    OH, OW = -(-H // stride), -(-W // stride)
    pad_h = max((OH - 1) * stride + K - H, 0)
    pad_w = max((OW - 1) * stride + K - W, 0)
    pads = ((pad_h // 2, pad_h - pad_h // 2), (pad_w // 2, pad_w - pad_w // 2))
    y = jax.lax.conv_general_dilated(
        x_nchw, weight_oihw, window_strides=(stride, stride), padding=pads,
        dimension_numbers=("NCHW", "OIHW", "NCHW"))
    y = y + bias.reshape(1, -1, 1, 1)
    return jnp.where(y >= 0.0, y, NEG_SLOPE * y)


if __name__ == "__main__":
    key = jax.random.PRNGKey(0)

    def run_case(batch, in_ch, out_ch, hw, K=5, tol=5e-2):
        kx, kw_, kb = jax.random.split(jax.random.fold_in(key, in_ch * 1000 + hw), 3)
        x = jax.random.normal(kx, (batch, in_ch, hw, hw), dtype=jnp.float32)
        fan_in = in_ch * K * K
        bound = 1.0 / (fan_in ** 0.5)
        weight = jax.random.uniform(kw_, (out_ch, in_ch, K, K), jnp.float32, -bound, bound)
        bias = jax.random.uniform(kb, (out_ch,), jnp.float32, -bound, bound)

        fwd = jax.jit(functools.partial(downscale_forward, kernel_size=K, stride=2))
        y = jax.block_until_ready(fwd(x, weight, bias))
        y_ref = _reference(x, weight, bias, kernel_size=K, stride=2)

        oh = -(-hw // 2)
        assert y.shape == (batch, out_ch, oh, oh), y.shape
        err = float(jnp.max(jnp.abs(y - y_ref)))
        assert err < tol, f"max abs err {err} for case {(batch, in_ch, out_ch, hw)}"

    # Primary config matching the module (small-Cin fold-taps path).
    run_case(batch=2, in_ch=4, out_ch=8, hw=16)
    # Wider channels + odd spatial size (per-tap path, asymmetric SAME padding,
    # padded Cout) to exercise the second code path.
    run_case(batch=1, in_ch=32, out_ch=12, hw=11)

    print("KERNEL_OK")
</pallas_src>

<mosaic_0001>
module attributes {stable_mosaic.version = 11 : i64} {
  func.func @_down_kernel(%arg0: i32, %arg1: i32, %arg2: memref<1x1x16x176xbf16, #tpu.memory_space<vmem>>, %arg3: memref<1x1x16x176xbf16, #tpu.memory_space<vmem>>, %arg4: memref<1x1x16x176xbf16, #tpu.memory_space<vmem>>, %arg5: memref<1x1x16x176xbf16, #tpu.memory_space<vmem>>, %arg6: memref<8x400xbf16, #tpu.memory_space<vmem>>, %arg7: memref<8x1xf32, #tpu.memory_space<vmem>>, %arg8: memref<1x8x128xf32, #tpu.memory_space<vmem>>) attributes {dimension_semantics = [#tpu.dimension_semantics<parallel>, #tpu.dimension_semantics<parallel>], iteration_bounds = array<i64: 2, 1>, scalar_prefetch = 0 : i64, scratch_operands = 0 : i64, tpu.core_type = #tpu.core_type<tc>, window_params = [{transform_indices = @transform_0, window_bounds = array<i64: 1, 1, 16, 176>}, {transform_indices = @transform_1, window_bounds = array<i64: 1, 1, 16, 176>}, {transform_indices = @transform_2, window_bounds = array<i64: 1, 1, 16, 176>}, {transform_indices = @transform_3, window_bounds = array<i64: 1, 1, 16, 176>}, {pipeline_mode = #tpu.pipeline_mode<synchronous>, transform_indices = @transform_4, window_bounds = array<i64: 8, 400>}, {pipeline_mode = #tpu.pipeline_mode<synchronous>, transform_indices = @transform_5, window_bounds = array<i64: 8, 1>}, {transform_indices = @transform_6, window_bounds = array<i64: 1, 8, 128>}]} {
    %c0 = arith.constant 0 : index
    %c0_0 = arith.constant 0 : index
    %c0_1 = arith.constant 0 : index
    %c0_2 = arith.constant 0 : index
    %0 = vector.load %arg2[%c0, %c0_0, %c0_1, %c0_2] : memref<1x1x16x176xbf16, #tpu.memory_space<vmem>>, vector<1x1x16x176xbf16>
    %1 = vector.shape_cast %0 : vector<1x1x16x176xbf16> to vector<16x176xbf16>
    %c0_3 = arith.constant 0 : index
    %c0_4 = arith.constant 0 : index
    %c0_5 = arith.constant 0 : index
    %c0_6 = arith.constant 0 : index
    %2 = vector.load %arg3[%c0_3, %c0_4, %c0_5, %c0_6] : memref<1x1x16x176xbf16, #tpu.memory_space<vmem>>, vector<1x1x16x176xbf16>
    %3 = vector.shape_cast %2 : vector<1x1x16x176xbf16> to vector<16x176xbf16>
    %c0_7 = arith.constant 0 : index
    %c0_8 = arith.constant 0 : index
    %c0_9 = arith.constant 0 : index
    %c0_10 = arith.constant 0 : index
    %4 = vector.load %arg4[%c0_7, %c0_8, %c0_9, %c0_10] : memref<1x1x16x176xbf16, #tpu.memory_space<vmem>>, vector<1x1x16x176xbf16>
    %5 = vector.shape_cast %4 : vector<1x1x16x176xbf16> to vector<16x176xbf16>
    %c0_11 = arith.constant 0 : index
    %c0_12 = arith.constant 0 : index
    %c0_13 = arith.constant 0 : index
    %c0_14 = arith.constant 0 : index
    %6 = vector.load %arg5[%c0_11, %c0_12, %c0_13, %c0_14] : memref<1x1x16x176xbf16, #tpu.memory_space<vmem>>, vector<1x1x16x176xbf16>
    %7 = vector.shape_cast %6 : vector<1x1x16x176xbf16> to vector<16x176xbf16>
    %8 = vector.extract_strided_slice %1 {offsets = [0, 0], sizes = [16, 128], strides = [1, 1]} : vector<16x176xbf16> to vector<16x128xbf16>
    %9 = vector.extract_strided_slice %3 {offsets = [0, 0], sizes = [16, 128], strides = [1, 1]} : vector<16x176xbf16> to vector<16x128xbf16>
    %10 = vector.extract_strided_slice %1 {offsets = [0, 1], sizes = [16, 128], strides = [1, 1]} : vector<16x176xbf16> to vector<16x128xbf16>
    %11 = vector.extract_strided_slice %3 {offsets = [0, 1], sizes = [16, 128], strides = [1, 1]} : vector<16x176xbf16> to vector<16x128xbf16>
    %12 = vector.extract_strided_slice %1 {offsets = [0, 2], sizes = [16, 128], strides = [1, 1]} : vector<16x176xbf16> to vector<16x128xbf16>
    %13 = vector.extract_strided_slice %5 {offsets = [0, 0], sizes = [16, 128], strides = [1, 1]} : vector<16x176xbf16> to vector<16x128xbf16>
    %14 = vector.extract_strided_slice %7 {offsets = [0, 0], sizes = [16, 128], strides = [1, 1]} : vector<16x176xbf16> to vector<16x128xbf16>
    %15 = vector.extract_strided_slice %5 {offsets = [0, 1], sizes = [16, 128], strides = [1, 1]} : vector<16x176xbf16> to vector<16x128xbf16>
    %16 = vector.extract_strided_slice %7 {offsets = [0, 1], sizes = [16, 128], strides = [1, 1]} : vector<16x176xbf16> to vector<16x128xbf16>
    %17 = vector.extract_strided_slice %5 {offsets = [0, 2], sizes = [16, 128], strides = [1, 1]} : vector<16x176xbf16> to vector<16x128xbf16>
    %18 = vector.extract_strided_slice %1 {offsets = [0, 16], sizes = [16, 128], strides = [1, 1]} : vector<16x176xbf16> to vector<16x128xbf16>
    %19 = vector.extract_strided_slice %3 {offsets = [0, 16], sizes = [16, 128], strides = [1, 1]} : vector<16x176xbf16> to vector<16x128xbf16>
    %20 = vector.extract_strided_slice %1 {offsets = [0, 17], sizes = [16, 128], strides = [1, 1]} : vector<16x176xbf16> to vector<16x128xbf16>
    %21 = vector.extract_strided_slice %3 {offsets = [0, 17], sizes = [16, 128], strides = [1, 1]} : vector<16x176xbf16> to vector<16x128xbf16>
    %22 = vector.extract_strided_slice %1 {offsets = [0, 18], sizes = [16, 128], strides = [1, 1]} : vector<16x176xbf16> to vector<16x128xbf16>
    %23 = vector.extract_strided_slice %5 {offsets = [0, 16], sizes = [16, 128], strides = [1, 1]} : vector<16x176xbf16> to vector<16x128xbf16>
    %24 = vector.extract_strided_slice %7 {offsets = [0, 16], sizes = [16, 128], strides = [1, 1]} : vector<16x176xbf16> to vector<16x128xbf16>
    %25 = vector.extract_strided_slice %5 {offsets = [0, 17], sizes = [16, 128], strides = [1, 1]} : vector<16x176xbf16> to vector<16x128xbf16>
    %26 = vector.extract_strided_slice %7 {offsets = [0, 17], sizes = [16, 128], strides = [1, 1]} : vector<16x176xbf16> to vector<16x128xbf16>
    %27 = vector.extract_strided_slice %5 {offsets = [0, 18], sizes = [16, 128], strides = [1, 1]} : vector<16x176xbf16> to vector<16x128xbf16>
    %28 = vector.extract_strided_slice %1 {offsets = [0, 32], sizes = [16, 128], strides = [1, 1]} : vector<16x176xbf16> to vector<16x128xbf16>
    %29 = vector.extract_strided_slice %3 {offsets = [0, 32], sizes = [16, 128], strides = [1, 1]} : vector<16x176xbf16> to vector<16x128xbf16>
    %30 = vector.extract_strided_slice %1 {offsets = [0, 33], sizes = [16, 128], strides = [1, 1]} : vector<16x176xbf16> to vector<16x128xbf16>
    %31 = vector.extract_strided_slice %3 {offsets = [0, 33], sizes = [16, 128], strides = [1, 1]} : vector<16x176xbf16> to vector<16x128xbf16>
    %32 = vector.extract_strided_slice %1 {offsets = [0, 34], sizes = [16, 128], strides = [1, 1]} : vector<16x176xbf16> to vector<16x128xbf16>
    %33 = tpu.concatenate %8, %9, %10, %11, %12, %13, %14, %15, %16, %17, %18, %19, %20, %21, %22, %23 in 0 : vector<16x128xbf16>, vector<16x128xbf16>, vector<16x128xbf16>, vector<16x128xbf16>, vector<16x128xbf16>, vector<16x128xbf16>, vector<16x128xbf16>, vector<16x128xbf16>, vector<16x128xbf16>, vector<16x128xbf16>, vector<16x128xbf16>, vector<16x128xbf16>, vector<16x128xbf16>, vector<16x128xbf16>, vector<16x128xbf16>, vector<16x128xbf16> -> vector<256x128xbf16>
    %34 = tpu.concatenate %24, %25, %26, %27, %28, %29, %30, %31, %32 in 0 : vector<16x128xbf16>, vector<16x128xbf16>, vector<16x128xbf16>, vector<16x128xbf16>, vector<16x128xbf16>, vector<16x128xbf16>, vector<16x128xbf16>, vector<16x128xbf16>, vector<16x128xbf16> -> vector<144x128xbf16>
    %35 = tpu.concatenate %33, %34 in 0 : vector<256x128xbf16>, vector<144x128xbf16> -> vector<400x128xbf16>
    %c0_15 = arith.constant 0 : index
    %c0_16 = arith.constant 0 : index
    %36 = vector.load %arg6[%c0_15, %c0_16] : memref<8x400xbf16, #tpu.memory_space<vmem>>, vector<8x400xbf16>
    %cst = arith.constant dense<0.000000e+00> : vector<8x128xf32>
    %37 = tpu.matmul %36, %35, %cst {dimension_numbers = #tpu.dot_dimension_numbers<[1], [0], [0], [1], [0, 0, 1, 1], [], []>} : vector<8x400xbf16>, vector<400x128xbf16>, vector<8x128xf32> -> vector<8x128xf32>
    %c0_17 = arith.constant 0 : index
    %c0_18 = arith.constant 0 : index
    %38 = vector.load %arg7[%c0_17, %c0_18] : memref<8x1xf32, #tpu.memory_space<vmem>>, vector<8x1xf32>
    %39 = vector.broadcast %38 : vector<8x1xf32> to vector<8x128xf32>
    %40 = arith.addf %37, %39 : vector<8x128xf32>
    %cst_19 = arith.constant 0.000000e+00 : f32
    %41 = vector.broadcast %cst_19 : f32 to vector<8x128xf32>
    %42 = arith.cmpf oge, %40, %41 : vector<8x128xf32>
    %cst_20 = arith.constant 1.000000e-01 : f32
    %43 = vector.broadcast %cst_20 : f32 to vector<8x128xf32>
    %44 = arith.mulf %43, %40 : vector<8x128xf32>
    %45 = arith.select %42, %40, %44 : vector<8x128xi1>, vector<8x128xf32>
    %c0_21 = arith.constant 0 : index
    %c0_22 = arith.constant 0 : index
    %c0_23 = arith.constant 0 : index
    %46 = vector.load %arg8[%c0_21, %c0_22, %c0_23] : memref<1x8x128xf32, #tpu.memory_space<vmem>>, vector<1x8x128xf32>
    %47 = vector.shape_cast %46 : vector<1x8x128xf32> to vector<8x128xf32>
    %48 = vector.shape_cast %45 : vector<8x128xf32> to vector<1x8x128xf32>
    tpu.vector_store %arg8[%c0_21, %c0_22, %c0_23], %48 {strides = array<i32>} : memref<1x8x128xf32, #tpu.memory_space<vmem>>, vector<1x8x128xf32>,
    return
  }
  func.func @transform_0(%arg0: i32, %arg1: i32) -> (i32, i32, i32, i32) {
    %c0_i32 = arith.constant 0 : i32
    %c0_i32_0 = arith.constant 0 : i32
    %c0_i32_1 = arith.constant 0 : i32
    return %arg0, %arg1, %c0_i32, %c0_i32_0 : i32, i32, i32, i32
  }
  func.func @transform_1(%arg0: i32, %arg1: i32) -> (i32, i32, i32, i32) {
    %c0_i32 = arith.constant 0 : i32
    %c0_i32_0 = arith.constant 0 : i32
    %c0_i32_1 = arith.constant 0 : i32
    return %arg0, %arg1, %c0_i32, %c0_i32_0 : i32, i32, i32, i32
  }
  func.func @transform_2(%arg0: i32, %arg1: i32) -> (i32, i32, i32, i32) {
    %c0_i32 = arith.constant 0 : i32
    %c0_i32_0 = arith.constant 0 : i32
    %c0_i32_1 = arith.constant 0 : i32
    return %arg0, %arg1, %c0_i32, %c0_i32_0 : i32, i32, i32, i32
  }
  func.func @transform_3(%arg0: i32, %arg1: i32) -> (i32, i32, i32, i32) {
    %c0_i32 = arith.constant 0 : i32
    %c0_i32_0 = arith.constant 0 : i32
    %c0_i32_1 = arith.constant 0 : i32
    return %arg0, %arg1, %c0_i32, %c0_i32_0 : i32, i32, i32, i32
  }
  func.func @transform_4(%arg0: i32, %arg1: i32) -> (i32, i32) {
    %c0_i32 = arith.constant 0 : i32
    %c0_i32_0 = arith.constant 0 : i32
    %c0_i32_1 = arith.constant 0 : i32
    return %c0_i32, %c0_i32_0 : i32, i32
  }
  func.func @transform_5(%arg0: i32, %arg1: i32) -> (i32, i32) {
    %c0_i32 = arith.constant 0 : i32
    %c0_i32_0 = arith.constant 0 : i32
    %c0_i32_1 = arith.constant 0 : i32
    return %c0_i32, %c0_i32_0 : i32, i32
  }
  func.func @transform_6(%arg0: i32, %arg1: i32) -> (i32, i32, i32) {
    %c0_i32 = arith.constant 0 : i32
    %c0_i32_0 = arith.constant 0 : i32
    return %arg0, %c0_i32, %arg1 : i32, i32, i32
  }
}

</mosaic_0001>

<llo_original>
// kernel: downscale_forward.1
$region0: #{downscale_forward.1}
  #allocation0 [shape = 'u32[]', space=smem, size = 0x4, offset = 0x4, fixed_abs, tag = 'smem constant byte address 0x4 - core index']
  #allocation1 [shape = 'u32[72,128]{1,0:T(1,128)}', space=vmem, size = 0x9000, scoped, tag = 'internal scratch']
  %s0 = inlined_call_operand.vmem [shape: bf16[2,1,16,176], index: 0, kind: input, shape index: {}]
  %s1 = inlined_call_operand.vmem [shape: bf16[2,1,16,176], index: 1, kind: input, shape index: {}]
  %s2 = inlined_call_operand.vmem [shape: bf16[2,1,16,176], index: 2, kind: input, shape index: {}]
  %s3 = inlined_call_operand.vmem [shape: bf16[2,1,16,176], index: 3, kind: input, shape index: {}]
  %s4 = inlined_call_operand.vmem [shape: bf16[8,400], index: 4, kind: input, shape index: {}]
  %s5 = inlined_call_operand.vmem [shape: f32[8,1], index: 5, kind: input, shape index: {}]
  %s6 = inlined_call_operand.vmem [shape: f32[2,8,128], index: 6, kind: output, shape index: {}]
  %s7 = sld [smem:[#allocation0]]
  $region57: #{downscale_forward.1} parent=0
    _
  %s9 = ssub.s32 1, %s7
  %s10 = scalar_select 0, %s9, %s7
  loop: start=0, step=1, limit=4
  $region2: #{downscale_forward.1} parent=0 // loop_pre_header
    _
  $region3: #{downscale_forward.1} parent=0 // loop_header
    %s12 = sphi 0, %s16
    %p13 = scmp.ge.s32.totalorder %s12, 4
    %s19 = sphi 0, %s31
    %s20 = sphi 0, %s27
    %s21 = sphi 0, %s19
    %s22 = sphi 0, %s20
    %s23 = sphi 0, %s21
    %s24 = sphi 0, %s22
    %s36 = sphi 0, %s38
    %s39 = sphi 0, %s36
    %s40 = sphi 0, %s39
    %s56 = sphi 0, %s40
    %s64 = sphi 0, %s66
    %s67 = sphi 0, %s64
    %s68 = sphi 0, %s67
    %s84 = sphi 0, %s68
    %s92 = sphi 0, %s94
    %s95 = sphi 0, %s92
    %s96 = sphi 0, %s95
    %s112 = sphi 0, %s96
    %s120 = sphi 0, %s122
    %s123 = sphi 0, %s120
    %s124 = sphi 0, %s123
    %s140 = sphi 0, %s124
    %s144 = sphi 0, %s144
    %s146 = sphi 0, %s144
    %s147 = sphi 0, %s146
    %s161 = sphi 0, %s147
    %s165 = sphi 0, %s165
    %s167 = sphi 0, %s165
    %s168 = sphi 0, %s167
    %s182 = sphi 0, %s168
    %s190 = sphi 0, %s192
    %s193 = sphi 0, %s190
    %s194 = sphi 0, %s193
    %s210 = sphi 0, %s194
  $region4: #{downscale_forward.1} parent=0 // loop_header_branch
    %15 = sbr.rel (%p13) target = $region8
  $region5: #{downscale_forward.1} parent=0 // loop_body
    %s17 = ssub.s32 %s12, 1
    %s18 = ssub.s32 %s12, 2
    %s25 = sadd.s32 1, %s20
    %p26 = scmp.ge.s32.totalorder %s25, 1
    %s27 = scalar_select %p26, 0, %s25
    %s28 = sadd.s32 1, %s19
    %s29 = scalar_select %p26, %s28, %s19
    %p30 = scmp.ge.s32.totalorder %s29, 2
    %s31 = scalar_select %p30, 0, %s29
    %s32 = ssub.s32 %s19, %s31
    %s33 = ssub.s32 %s20, %s27
    %s34 = sor.u32 %s32, %s33
    %p35 = scmp.eq.s32.totalorder %s34, 0
    %s37 = sadd.s32 %s36, 1
    %s38 = scalar_select %p35, %s36, %s37
    %p41 = pneg %p35
    %p42 = scmp.eq.s32.totalorder %s12, 1
    %p43 = por %p41, %p42
    %p44 = scmp.ne.s32.totalorder %s36, %s39
    %p45 = scmp.eq.s32.totalorder %s12, 0
    %p46 = por %p44, %p45
    %p47 = scmp.ne.s32.totalorder %s36, %s39
    %p48 = scmp.eq.s32.totalorder %s17, 1
    %p49 = por %p47, %p48
    %p50 = scmp.ne.s32.totalorder %s39, %s40
    %p51 = scmp.eq.s32.totalorder %s17, 0
    %p52 = por %p50, %p51
    %p53 = scmp.ne.s32.totalorder %s39, %s40
    %p54 = scmp.eq.s32.totalorder %s18, 1
    %p55 = por %p53, %p54
    %p57 = scmp.ne.s32.totalorder %s40, %s56
    %p58 = scmp.eq.s32.totalorder %s18, 0
    %p59 = por %p57, %p58
    %s60 = ssub.s32 %s19, %s31
    %s61 = ssub.s32 %s20, %s27
    %s62 = sor.u32 %s60, %s61
    %p63 = scmp.eq.s32.totalorder %s62, 0
    %s65 = sadd.s32 %s64, 1
    %s66 = scalar_select %p63, %s64, %s65
    %p69 = pneg %p63
    %p70 = scmp.eq.s32.totalorder %s12, 1
    %p71 = por %p69, %p70
    %p72 = scmp.ne.s32.totalorder %s64, %s67
    %p73 = scmp.eq.s32.totalorder %s12, 0
    %p74 = por %p72, %p73
    %p75 = scmp.ne.s32.totalorder %s64, %s67
    %p76 = scmp.eq.s32.totalorder %s17, 1
    %p77 = por %p75, %p76
    %p78 = scmp.ne.s32.totalorder %s67, %s68
    %p79 = scmp.eq.s32.totalorder %s17, 0
    %p80 = por %p78, %p79
    %p81 = scmp.ne.s32.totalorder %s67, %s68
    %p82 = scmp.eq.s32.totalorder %s18, 1
    %p83 = por %p81, %p82
    %p85 = scmp.ne.s32.totalorder %s68, %s84
    %p86 = scmp.eq.s32.totalorder %s18, 0
    %p87 = por %p85, %p86
    %s88 = ssub.s32 %s19, %s31
    %s89 = ssub.s32 %s20, %s27
    %s90 = sor.u32 %s88, %s89
    %p91 = scmp.eq.s32.totalorder %s90, 0
    %s93 = sadd.s32 %s92, 1
    %s94 = scalar_select %p91, %s92, %s93
    %p97 = pneg %p91
    %p98 = scmp.eq.s32.totalorder %s12, 1
    %p99 = por %p97, %p98
    %p100 = scmp.ne.s32.totalorder %s92, %s95
    %p101 = scmp.eq.s32.totalorder %s12, 0
    %p102 = por %p100, %p101
    %p103 = scmp.ne.s32.totalorder %s92, %s95
    %p104 = scmp.eq.s32.totalorder %s17, 1
    %p105 = por %p103, %p104
    %p106 = scmp.ne.s32.totalorder %s95, %s96
    %p107 = scmp.eq.s32.totalorder %s17, 0
    %p108 = por %p106, %p107
    %p109 = scmp.ne.s32.totalorder %s95, %s96
    %p110 = scmp.eq.s32.totalorder %s18, 1
    %p111 = por %p109, %p110
    %p113 = scmp.ne.s32.totalorder %s96, %s112
    %p114 = scmp.eq.s32.totalorder %s18, 0
    %p115 = por %p113, %p114
    %s116 = ssub.s32 %s19, %s31
    %s117 = ssub.s32 %s20, %s27
    %s118 = sor.u32 %s116, %s117
    %p119 = scmp.eq.s32.totalorder %s118, 0
    %s121 = sadd.s32 %s120, 1
    %s122 = scalar_select %p119, %s120, %s121
    %p125 = pneg %p119
    %p126 = scmp.eq.s32.totalorder %s12, 1
    %p127 = por %p125, %p126
    %p128 = scmp.ne.s32.totalorder %s120, %s123
    %p129 = scmp.eq.s32.totalorder %s12, 0
    %p130 = por %p128, %p129
    %p131 = scmp.ne.s32.totalorder %s120, %s123
    %p132 = scmp.eq.s32.totalorder %s17, 1
    %p133 = por %p131, %p132
    %p134 = scmp.ne.s32.totalorder %s123, %s124
    %p135 = scmp.eq.s32.totalorder %s17, 0
    %p136 = por %p134, %p135
    %p137 = scmp.ne.s32.totalorder %s123, %s124
    %p138 = scmp.eq.s32.totalorder %s18, 1
    %p139 = por %p137, %p138
    %p141 = scmp.ne.s32.totalorder %s124, %s140
    %p142 = scmp.eq.s32.totalorder %s18, 0
    %p143 = por %p141, %p142
    %s145 = sadd.s32 %s144, 1
    %p148 = scmp.eq.s32.totalorder %s12, 1
    %p149 = scmp.ne.s32.totalorder %s144, %s146
    %p150 = scmp.eq.s32.totalorder %s12, 0
    %p151 = por %p149, %p150
    %p152 = scmp.ne.s32.totalorder %s144, %s146
    %p153 = scmp.eq.s32.totalorder %s17, 1
    %p154 = por %p152, %p153
    %p155 = scmp.ne.s32.totalorder %s146, %s147
    %p156 = scmp.eq.s32.totalorder %s17, 0
    %p157 = por %p155, %p156
    %p158 = scmp.ne.s32.totalorder %s146, %s147
    %p159 = scmp.eq.s32.totalorder %s18, 1
    %p160 = por %p158, %p159
    %p162 = scmp.ne.s32.totalorder %s147, %s161
    %p163 = scmp.eq.s32.totalorder %s18, 0
    %p164 = por %p162, %p163
    %s166 = sadd.s32 %s165, 1
    %p169 = scmp.eq.s32.totalorder %s12, 1
    %p170 = scmp.ne.s32.totalorder %s165, %s167
    %p171 = scmp.eq.s32.totalorder %s12, 0
    %p172 = por %p170, %p171
    %p173 = scmp.ne.s32.totalorder %s165, %s167
    %p174 = scmp.eq.s32.totalorder %s17, 1
    %p175 = por %p173, %p174
    %p176 = scmp.ne.s32.totalorder %s167, %s168
    %p177 = scmp.eq.s32.totalorder %s17, 0
    %p178 = por %p176, %p177
    %p179 = scmp.ne.s32.totalorder %s167, %s168
    %p180 = scmp.eq.s32.totalorder %s18, 1
    %p181 = por %p179, %p180
    %p183 = scmp.ne.s32.totalorder %s168, %s182
    %p184 = scmp.eq.s32.totalorder %s18, 0
    %p185 = por %p183, %p184
    %s186 = ssub.s32 %s19, %s31
    %s187 = ssub.s32 %s20, %s27
    %s188 = sor.u32 %s186, %s187
    %p189 = scmp.eq.s32.totalorder %s188, 0
    %s191 = sadd.s32 %s190, 1
    %s192 = scalar_select %p189, %s190, %s191
    %p195 = pneg %p189
    %p196 = scmp.eq.s32.totalorder %s12, 1
    %p197 = por %p195, %p196
    %p198 = scmp.ne.s32.totalorder %s190, %s193
    %p199 = scmp.eq.s32.totalorder %s12, 0
    %p200 = por %p198, %p199
    %p201 = scmp.ne.s32.totalorder %s190, %s193
    %p202 = scmp.eq.s32.totalorder %s17, 1
    %p203 = por %p201, %p202
    %p204 = scmp.ne.s32.totalorder %s193, %s194
    %p205 = scmp.eq.s32.totalorder %s17, 0
    %p206 = por %p204, %p205
    %p207 = scmp.ne.s32.totalorder %s193, %s194
    %p208 = scmp.eq.s32.totalorder %s18, 1
    %p209 = por %p207, %p208
    %p211 = scmp.ne.s32.totalorder %s194, %s210
    %p212 = scmp.eq.s32.totalorder %s18, 0
    %p213 = por %p211, %p212
    %p214 = scmp.le.s32.totalorder 1, %s12
    %p215 = scmp.lt.s32.totalorder %s12, 3
    %p216 = pnand %p214, %p215
    %p217 = pneg %p216
    // Predicated region
    $region9: #{downscale_forward.1} parent=5 // pred_check
      _
    $region10: #{downscale_forward.1} parent=5 // pred_check_branch
      %219 = sbr.rel (%p216) target = $region12
    $region11: #{downscale_forward.1} parent=5 // pred_region
      %s220 = ssub.s32 %s12, 1
      // Predicated region
      $region13: #{downscale_forward.1} parent=11 // pred_check
        %p221 = pneg %p157
      $region14: #{downscale_forward.1} parent=11 // pred_check_branch
        %223 = sbr.rel (%p221) target = $region16
      $region15: #{downscale_forward.1} parent=11 // pred_region
        _
      $region16: #{downscale_forward.1} parent=11 // pred_fallthru
        _
      // Predicated region
      $region17: #{downscale_forward.1} parent=11 // pred_check
        %p224 = pneg %p178
      $region18: #{downscale_forward.1} parent=11 // pred_check_branch
        %226 = sbr.rel (%p224) target = $region20
      $region19: #{downscale_forward.1} parent=11 // pred_region
        _
      $region20: #{downscale_forward.1} parent=11 // pred_fallthru
        _
    $region12: #{downscale_forward.1} parent=5 // pred_fallthru
      _
    %p227 = scmp.lt.s32.totalorder %s12, 2
    // Predicated region
    $region21: #{downscale_forward.1} parent=5 // pred_check
      %p228 = pneg %p227
    $region22: #{downscale_forward.1} parent=5 // pred_check_branch
      %230 = sbr.rel (%p228) target = $region24
    $region23: #{downscale_forward.1} parent=5 // pred_region
      // Predicated region
      $region25: #{downscale_forward.1} parent=23 // pred_check
        %p231 = pneg %p46
      $region26: #{downscale_forward.1} parent=23 // pred_check_branch
        %233 = sbr.rel (%p231) target = $region28
      $region27: #{downscale_forward.1} parent=23 // pred_region
        %p234 = scmp.lt.s32.totalorder %s19, 1
        %s235 = scalar_select %p234, %s19, 1
        %p236 = scmp.lt.s32.totalorder %s20, 0
        %s237 = scalar_select %p236, %s20, 0
        %s238 = smul.addr %s237, 4
        %s239 = smul.addr %s235, 4
        %s240 = sadd.s32 %s238, %s239
        %s241 = smul.addr %s240, 4
        %s242 = scalar_lea.vmem %s0, %s241
      $region28: #{downscale_forward.1} parent=23 // pred_fallthru
        _
      // Predicated region
      $region29: #{downscale_forward.1} parent=23 // pred_check
        %p243 = pneg %p74
      $region30: #{downscale_forward.1} parent=23 // pred_check_branch
        %245 = sbr.rel (%p243) target = $region32
      $region31: #{downscale_forward.1} parent=23 // pred_region
        %p246 = scmp.lt.s32.totalorder %s19, 1
        %s247 = scalar_select %p246, %s19, 1
        %p248 = scmp.lt.s32.totalorder %s20, 0
        %s249 = scalar_select %p248, %s20, 0
        %s250 = smul.addr %s249, 4
        %s251 = smul.addr %s247, 4
        %s252 = sadd.s32 %s250, %s251
        %s253 = smul.addr %s252, 4
        %s254 = scalar_lea.vmem %s1, %s253
      $region32: #{downscale_forward.1} parent=23 // pred_fallthru
        _
      // Predicated region
      $region33: #{downscale_forward.1} parent=23 // pred_check
        %p255 = pneg %p102
      $region34: #{downscale_forward.1} parent=23 // pred_check_branch
        %257 = sbr.rel (%p255) target = $region36
      $region35: #{downscale_forward.1} parent=23 // pred_region
        %p258 = scmp.lt.s32.totalorder %s19, 1
        %s259 = scalar_select %p258, %s19, 1
        %p260 = scmp.lt.s32.totalorder %s20, 0
        %s261 = scalar_select %p260, %s20, 0
        %s262 = smul.addr %s261, 4
        %s263 = smul.addr %s259, 4
        %s264 = sadd.s32 %s262, %s263
        %s265 = smul.addr %s264, 4
        %s266 = scalar_lea.vmem %s2, %s265
      $region36: #{downscale_forward.1} parent=23 // pred_fallthru
        _
      // Predicated region
      $region37: #{downscale_forward.1} parent=23 // pred_check
        %p267 = pneg %p130
      $region38: #{downscale_forward.1} parent=23 // pred_check_branch
        %269 = sbr.rel (%p267) target = $region40
      $region39: #{downscale_forward.1} parent=23 // pred_region
        %p270 = scmp.lt.s32.totalorder %s19, 1
        %s271 = scalar_select %p270, %s19, 1
        %p272 = scmp.lt.s32.totalorder %s20, 0
        %s273 = scalar_select %p272, %s20, 0
        %s274 = smul.addr %s273, 4
        %s275 = smul.addr %s271, 4
        %s276 = sadd.s32 %s274, %s275
        %s277 = smul.addr %s276, 4
        %s278 = scalar_lea.vmem %s3, %s277
      $region40: #{downscale_forward.1} parent=23 // pred_fallthru
        _
    $region24: #{downscale_forward.1} parent=5 // pred_fallthru
      _
    %p279 = scmp.le.s32.totalorder 1, %s12
    %p280 = scmp.lt.s32.totalorder %s12, 3
    %p281 = pnand %p279, %p280
    %p282 = pneg %p281
    // Predicated region
    $region41: #{downscale_forward.1} parent=5 // pred_check
      _
    $region42: #{downscale_forward.1} parent=5 // pred_check_branch
      %284 = sbr.rel (%p281) target = $region44
    $region43: #{downscale_forward.1} parent=5 // pred_region
      %s285 = ssub.s32 %s12, 1
      %p286 = scmp.lt.s32.totalorder %s21, 1
      %s287 = scalar_select %p286, %s21, 1
      %p288 = scmp.lt.s32.totalorder %s22, 0
      %s289 = scalar_select %p288, %s22, 0
      %s290 = smul.addr %s289, 4
      %s291 = smul.addr %s287, 4
      %s292 = sadd.s32 %s290, %s291
      %s293 = smul.addr %s292, 4
      %s294 = scalar_lea.vmem %s0, %s293
      %p295 = pneg %p52
      %p296 = pneg %p49
      %p297 = scmp.lt.s32.totalorder %s21, 1
      %s298 = scalar_select %p297, %s21, 1
      %p299 = scmp.lt.s32.totalorder %s22, 0
      %s300 = scalar_select %p299, %s22, 0
      %s301 = smul.addr %s300, 4
      %s302 = smul.addr %s298, 4
      %s303 = sadd.s32 %s301, %s302
      %s304 = smul.addr %s303, 4
      %s305 = scalar_lea.vmem %s1, %s304
      %p306 = pneg %p80
      %p307 = pneg %p77
      %p308 = scmp.lt.s32.totalorder %s21, 1
      %s309 = scalar_select %p308, %s21, 1
      %p310 = scmp.lt.s32.totalorder %s22, 0
      %s311 = scalar_select %p310, %s22, 0
      %s312 = smul.addr %s311, 4
      %s313 = smul.addr %s309, 4
      %s314 = sadd.s32 %s312, %s313
      %s315 = smul.addr %s314, 4
      %s316 = scalar_lea.vmem %s2, %s315
      %p317 = pneg %p108
      %p318 = pneg %p105
      %p319 = scmp.lt.s32.totalorder %s21, 1
      %s320 = scalar_select %p319, %s21, 1
      %p321 = scmp.lt.s32.totalorder %s22, 0
      %s322 = scalar_select %p321, %s22, 0
      %s323 = smul.addr %s322, 4
      %s324 = smul.addr %s320, 4
      %s325 = sadd.s32 %s323, %s324
      %s326 = smul.addr %s325, 4
      %s327 = scalar_lea.vmem %s3, %s326
      %p328 = pneg %p136
      %p329 = pneg %p133
      %p330 = pneg %p157
      %p331 = pneg %p154
      %p332 = pneg %p178
      %p333 = pneg %p175
      %p334 = pneg %p206
      %p335 = pneg %p203
      %p336 = scmp.lt.s32.totalorder %s21, 1
      %s337 = scalar_select %p336, %s21, 1
      %p338 = scmp.lt.s32.totalorder %s22, 0
      %s339 = scalar_select %p338, %s22, 0
      %s340 = sadd.s32 %s339, %s337
      %s341 = smul.addr %s340, 8
      %s342 = scalar_lea.vmem %s6, %s341
      %p343 = scmp.lt.s32.totalorder %s21, 1
      %s344 = scalar_select %p343, %s21, 1
      %p345 = scmp.lt.s32.totalorder %s22, 0
      %s346 = scalar_select %p345, %s22, 0
      %s347 = smul.addr %s346, 4
      %s348 = smul.addr %s344, 4
      %s349 = sadd.s32 %s347, %s348
      %s350 = smul.addr %s349, 4
      %s351 = scalar_lea.vmem %s0, %s350
      %p352 = scmp.lt.s32.totalorder %s21, 1
      %s353 = scalar_select %p352, %s21, 1
      %p354 = scmp.lt.s32.totalorder %s22, 0
      %s355 = scalar_select %p354, %s22, 0
      %s356 = smul.addr %s355, 4
      %s357 = smul.addr %s353, 4
      %s358 = sadd.s32 %s356, %s357
      %s359 = smul.addr %s358, 4
      %s360 = scalar_lea.vmem %s1, %s359
      %p361 = scmp.lt.s32.totalorder %s21, 1
      %s362 = scalar_select %p361, %s21, 1
      %p363 = scmp.lt.s32.totalorder %s22, 0
      %s364 = scalar_select %p363, %s22, 0
      %s365 = smul.addr %s364, 4
      %s366 = smul.addr %s362, 4
      %s367 = sadd.s32 %s365, %s366
      %s368 = smul.addr %s367, 4
      %s369 = scalar_lea.vmem %s2, %s368
      %p370 = scmp.lt.s32.totalorder %s21, 1
      %s371 = scalar_select %p370, %s21, 1
      %p372 = scmp.lt.s32.totalorder %s22, 0
      %s373 = scalar_select %p372, %s22, 0
      %s374 = smul.addr %s373, 4
      %s375 = smul.addr %s371, 4
      %s376 = sadd.s32 %s374, %s375
      %s377 = smul.addr %s376, 4
      %s378 = scalar_lea.vmem %s3, %s377
      %p379 = scmp.lt.s32.totalorder %s21, 1
      %s380 = scalar_select %p379, %s21, 1
      %p381 = scmp.lt.s32.totalorder %s22, 0
      %s382 = scalar_select %p381, %s22, 0
      %s383 = sadd.s32 %s382, %s380
      %s384 = smul.addr %s383, 8
      %s385 = scalar_lea.vmem %s6, %s384
      %v387 = vld [vmem:[%s351] sm:$0xff]
      %v388 = vld [vmem:[%s351 + $0x8] sm:$0xff]
      %v389 = vld [vmem:[%s360] sm:$0xff]
      %v390 = vld [vmem:[%s360 + $0x8] sm:$0xff]
      %v391 = vld [vmem:[%s369] sm:$0xff]
      %v392 = vld [vmem:[%s369 + $0x8] sm:$0xff]
      %v393 = vld [vmem:[%s378] sm:$0xff]
      %v394 = vld [vmem:[%s378 + $0x8] sm:$0xff]
      %v397 = vunpack.c.l.b16 %v387
      %v398 = vunpack.c.l.b16 %v388
      %v399 = vpack.c.b16 %v398, %v397
      %v403 = vunpack.c.l.b16 %v389
      %v404 = vunpack.c.l.b16 %v390
      %v405 = vpack.c.b16 %v404, %v403
      %v407 = vunpack.c.h.b16 %v387
      %v408 = vunpack.c.h.b16 %v388
      %v409 = vpack.c.b16 %v408, %v407
      %410 = vrot.lane.b32.xlu0 %v399, 127
      %v411 = vpop.permute.xlu0 %410
      %412 = vrot.lane.b32.xlu0 %v409, 127
      %v413 = vpop.permute.xlu0 %412
      %vm414 = vcmask 1039360
      %v415 = vsel %vm414, %v411, %v413
      %v417 = vunpack.c.h.b16 %v389
      %v418 = vunpack.c.h.b16 %v390
      %v419 = vpack.c.b16 %v418, %v417
      %420 = vrot.lane.b32.xlu0 %v405, 127
      %v421 = vpop.permute.xlu0 %420
      %422 = vrot.lane.b32.xlu0 %v419, 127
      %v423 = vpop.permute.xlu0 %422
      %v424 = vsel %vm414, %v421, %v423
      %426 = vrot.lane.b32.xlu0 %v399, 126
      %v427 = vpop.permute.xlu0 %426
      %428 = vrot.lane.b32.xlu0 %v409, 126
      %v429 = vpop.permute.xlu0 %428
      %vm430 = vcmask 1031168
      %v431 = vsel %vm430, %v427, %v429
      %v435 = vunpack.c.l.b16 %v391
      %v436 = vunpack.c.l.b16 %v392
      %v437 = vpack.c.b16 %v436, %v435
      %v441 = vunpack.c.l.b16 %v393
      %v442 = vunpack.c.l.b16 %v394
      %v443 = vpack.c.b16 %v442, %v441
      %v445 = vunpack.c.h.b16 %v391
      %v446 = vunpack.c.h.b16 %v392
      %v447 = vpack.c.b16 %v446, %v445
      %448 = vrot.lane.b32.xlu0 %v437, 127
      %v449 = vpop.permute.xlu0 %448
      %450 = vrot.lane.b32.xlu0 %v447, 127
      %v451 = vpop.permute.xlu0 %450
      %v452 = vsel %vm414, %v449, %v451
      %v454 = vunpack.c.h.b16 %v393
      %v455 = vunpack.c.h.b16 %v394
      %v456 = vpack.c.b16 %v455, %v454
      %457 = vrot.lane.b32.xlu0 %v443, 127
      %v458 = vpop.permute.xlu0 %457
      %459 = vrot.lane.b32.xlu0 %v456, 127
      %v460 = vpop.permute.xlu0 %459
      %v461 = vsel %vm414, %v458, %v460
      %463 = vrot.lane.b32.xlu0 %v437, 126
      %v464 = vpop.permute.xlu0 %463
      %465 = vrot.lane.b32.xlu0 %v447, 126
      %v466 = vpop.permute.xlu0 %465
      %v467 = vsel %vm430, %v464, %v466
      %469 = vrot.lane.b32.xlu0 %v399, 112
      %v470 = vpop.permute.xlu0 %469
      %471 = vrot.lane.b32.xlu0 %v409, 112
      %v472 = vpop.permute.xlu0 %471
      %vm473 = vcmask 916480
      %v474 = vsel %vm473, %v470, %v472
      %476 = vrot.lane.b32.xlu0 %v405, 112
      %v477 = vpop.permute.xlu0 %476
      %478 = vrot.lane.b32.xlu0 %v419, 112
      %v479 = vpop.permute.xlu0 %478
      %v480 = vsel %vm473, %v477, %v479
      %482 = vrot.lane.b32.xlu0 %v399, 111
      %v483 = vpop.permute.xlu0 %482
      %484 = vrot.lane.b32.xlu0 %v409, 111
      %v485 = vpop.permute.xlu0 %484
      %vm486 = vcmask 908288
      %v487 = vsel %vm486, %v483, %v485
      %489 = vrot.lane.b32.xlu0 %v405, 111
      %v490 = vpop.permute.xlu0 %489
      %491 = vrot.lane.b32.xlu0 %v419, 111
      %v492 = vpop.permute.xlu0 %491
      %v493 = vsel %vm486, %v490, %v492
      %495 = vrot.lane.b32.xlu0 %v399, 110
      %v496 = vpop.permute.xlu0 %495
      %497 = vrot.lane.b32.xlu0 %v409, 110
      %v498 = vpop.permute.xlu0 %497
      %vm499 = vcmask 900096
      %v500 = vsel %vm499, %v496, %v498
      %502 = vrot.lane.b32.xlu0 %v437, 112
      %v503 = vpop.permute.xlu0 %502
      %504 = vrot.lane.b32.xlu0 %v447, 112
      %v505 = vpop.permute.xlu0 %504
      %v506 = vsel %vm473, %v503, %v505
      %508 = vrot.lane.b32.xlu0 %v443, 112
      %v509 = vpop.permute.xlu0 %508
      %510 = vrot.lane.b32.xlu0 %v456, 112
      %v511 = vpop.permute.xlu0 %510
      %512 = vrot.lane.b32.xlu0 %v452, 112
      %v513 = vpop.permute.xlu0 %512
      %514 = vrot.lane.b32.xlu0 %v451, 112
      %v515 = vpop.permute.xlu0 %514
      %516 = vrot.lane.b32.xlu0 %v461, 112
      %v517 = vpop.permute.xlu0 %516
      %518 = vrot.lane.b32.xlu0 %v460, 112
      %v519 = vpop.permute.xlu0 %518
      %520 = vrot.lane.b32.xlu0 %v467, 112
      %v521 = vpop.permute.xlu0 %520
      %522 = vrot.lane.b32.xlu0 %v466, 112
      %v523 = vpop.permute.xlu0 %522
      %524 = vrot.lane.b32.xlu0 %v474, 112
      %v525 = vpop.permute.xlu0 %524
      %526 = vrot.lane.b32.xlu0 %v472, 112
      %v527 = vpop.permute.xlu0 %526
      %528 = vrot.lane.b32.xlu0 %v480, 112
      %v529 = vpop.permute.xlu0 %528
      %530 = vrot.lane.b32.xlu0 %v479, 112
      %v531 = vpop.permute.xlu0 %530
      %532 = vrot.lane.b32.xlu0 %v487, 112
      %v533 = vpop.permute.xlu0 %532
      %534 = vrot.lane.b32.xlu0 %v485, 112
      %v535 = vpop.permute.xlu0 %534
      %536 = vrot.lane.b32.xlu0 %v493, 112
      %v537 = vpop.permute.xlu0 %536
      %538 = vrot.lane.b32.xlu0 %v492, 112
      %v539 = vpop.permute.xlu0 %538
      %540 = vrot.lane.b32.xlu0 %v500, 112
      %v541 = vpop.permute.xlu0 %540
      %542 = vrot.lane.b32.xlu0 %v498, 112
      %v543 = vpop.permute.xlu0 %542
      %v544 = vsel %vm473, %v509, %v511
      %v545 = vsel %vm473, %v513, %v515
      %v546 = vsel %vm473, %v517, %v519
      %v547 = vsel %vm473, %v521, %v523
      %v548 = vsel %vm473, %v525, %v527
      %v549 = vsel %vm473, %v529, %v531
      %v550 = vsel %vm473, %v533, %v535
      %v551 = vsel %vm473, %v537, %v539
      %v552 = vsel %vm473, %v541, %v543
      %v562 = vld [vmem:[%s4] sm:$0xff]
      %v563 = vld [vmem:[%s4 + $0x8] sm:$0xff]
      %v564 = vld [vmem:[%s5] sm:$0xff]
      %566 = vset.pattern.permute.xlu0 0
      %567 = vperm.xlu0 %566, %v564
      %v568 = vpop.permute.xlu0 %567
      %v572 = vunpack.c.l.b16 %v562
      %v573 = vunpack.c.h.b16 %v562
      %v574 = vunpack.c.l.b16 %v563
      %v575 = vunpack.c.h.b16 %v563
      %v576 = vpack.c.b16 %v572, %v572
      %v577 = vpack.c.b16 %v573, %v573
      %v578 = vpack.c.b16 %v574, %v574
      %v579 = vpack.c.b16 %v575, %v575
      %vm583 = vcmask 130048
      %v585 = vsel %vm583, %v579, 0
      %587 = vmatpush.bf16.msra.mxu0 %v452
      %588 = vmatpush.bf16.msra.mxu0 %v443
      %589 = vmatpush.bf16.msra.mxu0 %v437
      %590 = vmatpush.bf16.msra.mxu0 %v431
      %591 = vmatpush.bf16.msra.mxu0 %v424
      %592 = vmatpush.bf16.msra.mxu0 %v415
      %593 = vmatpush.bf16.msra.mxu0 %v405
      %594 = vmatpush.bf16.msra.mxu0 %v399
      %595 = vmatmul.bf16.gmra.mxu0 %v576
      %v596 = vpop.f32.mrf.mxu0
      %v597 = vadd.f32 %v568, %v596
      %v598 = vpop.f32.mrf.mxu0
      %599 = vdwg.mxu0
      %600 = vmatpush.bf16.msra.mxu0 %v506
      %601 = vmatpush.bf16.msra.mxu0 %v500
      %602 = vmatpush.bf16.msra.mxu0 %v493
      %603 = vmatpush.bf16.msra.mxu0 %v487
      %604 = vmatpush.bf16.msra.mxu0 %v480
      %605 = vmatpush.bf16.msra.mxu0 %v474
      %606 = vmatpush.bf16.msra.mxu0 %v467
      %607 = vmatpush.bf16.msra.mxu0 %v461
      %608 = vmatmul.bf16.gmra.mxu0 %v577
      %v609 = vpop.f32.mrf.mxu0
      %v610 = vadd.f32 %v597, %v609
      %v611 = vpop.f32.mrf.mxu0
      %612 = vdwg.mxu0
      %613 = vmatpush.bf16.msra.mxu0 %v551
      %614 = vmatpush.bf16.msra.mxu0 %v550
      %615 = vmatpush.bf16.msra.mxu0 %v549
      %616 = vmatpush.bf16.msra.mxu0 %v548
      %617 = vmatpush.bf16.msra.mxu0 %v547
      %618 = vmatpush.bf16.msra.mxu0 %v546
      %619 = vmatpush.bf16.msra.mxu0 %v545
      %620 = vmatpush.bf16.msra.mxu0 %v544
      %621 = vmatmul.bf16.gmra.mxu0 %v578
      %v622 = vpop.f32.mrf.mxu0
      %v623 = vadd.f32 %v610, %v622
      %v624 = vpop.f32.mrf.mxu0
      %625 = vdwg.mxu0
      %626 = vmatpush.bf16.msra.mxu0 0
      %627 = vmatpush.bf16.msra.mxu0 0
      %628 = vmatpush.bf16.msra.mxu0 0
      %629 = vmatpush.bf16.msra.mxu0 0
      %630 = vmatpush.bf16.msra.mxu0 0
      %631 = vmatpush.bf16.msra.mxu0 0
      %632 = vmatpush.bf16.msra.mxu0 0
      %633 = vmatpush.bf16.msra.mxu0 %v552
      %634 = vmatmul.bf16.gmra.mxu0 %v585
      %v635 = vpop.f32.mrf.mxu0
      %v636 = vadd.f32 %v623, %v635
      %v637 = vpop.f32.mrf.mxu0
      %638 = vdwg.mxu0
      %vm639 = vcmp.ge.f32.partialorder %v636, 0.0
      %v640 = vmul.f32 %v636, 0.1
      %v641 = vsel %vm639, %v636, %v640
      %642 = vst [vmem:[%s385] sm:$0xff] %v641
      %p643 = scmp.lt.s32.totalorder %s21, 1
      %s644 = scalar_select %p643, %s21, 1
      %p645 = scmp.lt.s32.totalorder %s22, 0
      %s646 = scalar_select %p645, %s22, 0
      %s647 = sadd.s32 %s646, %s644
      %s648 = smul.addr %s647, 8
      %s649 = scalar_lea.vmem %s6, %s648
      // Predicated region
      $region45: #{downscale_forward.1} parent=43 // pred_check
        %p650 = pneg %p203
      $region46: #{downscale_forward.1} parent=43 // pred_check_branch
        %652 = sbr.rel (%p650) target = $region48
      $region47: #{downscale_forward.1} parent=43 // pred_region
        _
      $region48: #{downscale_forward.1} parent=43 // pred_fallthru
        _
    $region44: #{downscale_forward.1} parent=5 // pred_fallthru
      _
    %p653 = scmp.le.s32.totalorder 2, %s12
    // Predicated region
    $region49: #{downscale_forward.1} parent=5 // pred_check
      %p654 = pneg %p653
    $region50: #{downscale_forward.1} parent=5 // pred_check_branch
      %656 = sbr.rel (%p654) target = $region52
    $region51: #{downscale_forward.1} parent=5 // pred_region
      %s657 = ssub.s32 %s12, 2
      // Predicated region
      $region53: #{downscale_forward.1} parent=51 // pred_check
        %p658 = pneg %p209
      $region54: #{downscale_forward.1} parent=51 // pred_check_branch
        %660 = sbr.rel (%p658) target = $region56
      $region55: #{downscale_forward.1} parent=51 // pred_region
        %p661 = scmp.lt.s32.totalorder %s23, 1
        %s662 = scalar_select %p661, %s23, 1
        %p663 = scmp.lt.s32.totalorder %s24, 0
        %s664 = scalar_select %p663, %s24, 0
        %s665 = sadd.s32 %s664, %s662
        %s666 = smul.addr %s665, 8
        %s667 = scalar_lea.vmem %s6, %s666
      $region56: #{downscale_forward.1} parent=51 // pred_fallthru
        _
    $region52: #{downscale_forward.1} parent=5 // pred_fallthru
      _
  $region6: #{downscale_forward.1} parent=0 // loop_footer
    %s16 = sadd.s32 1, %s12
  $region7: #{downscale_forward.1} parent=0 // loop_footer_branch
    %11 = sbr.rel target = $region3
  $region8: #{downscale_forward.1} parent=0 // loop_exit
    _

</llo_original>
